<compile_context>
chip_gen: v6e
topology: v6e:2x2x1
jax: 0.10.0
libtpu: 0.0.40
codegen_flags: <defaults>
</compile_context>

<pallas_src>
import functools

import jax
import jax.numpy as jnp
from jax import lax
from jax.experimental import pallas as pl
from jax.experimental.pallas import tpu as pltpu


# ---------------------------------------------------------------------------
# Tile selection helpers
# ---------------------------------------------------------------------------
_ROW_TILES = (256, 128, 64, 32, 16, 8)     # sublane-ish (second-minor) tiles
_LANE_TILES = (512, 256, 128)              # lane (minor) tiles


def _pick_tile(dim, candidates):
    """Largest candidate that divides `dim`; otherwise the full dim (always legal)."""
    for c in candidates:
        if c <= dim and dim % c == 0:
            return c
    return dim


def _pick_attn_tq(S, D, in_bytes, wts_bytes, mask_bytes,
                  budget=20 * 1024 * 1024):
    """Largest query tile whose double-buffered VMEM footprint fits the budget.

    footprint ~ 2 * [ (q + out + K + V) + wts tile + mask tile ]  (v7x-safe:
    stays well under the 32 MiB default scoped VMEM limit / 64 MiB physical).
    """
    cands = [c for c in (512, 256, 128, 64, 32, 16, 8) if c <= S and S % c == 0]
    if not cands:
        cands = [S]
    for tq in cands:
        per_step = 2 * ((2 * tq * D + 2 * S * D) * in_bytes
                        + tq * S * wts_bytes + tq * S * mask_bytes)
        if per_step <= budget:
            return tq
    return cands[-1]


# ---------------------------------------------------------------------------
# Generic batched linear GEMM kernel:  out[p] = x @ w[p] + b[p]
#   x: (B, S, K)   w: (P, K, N)   b: (P, 1, N)   out: (P, B, S, N)
# Reduction over K is the last grid axis with an f32 VMEM accumulator.
# ---------------------------------------------------------------------------
def _linear_kernel(x_ref, w_ref, b_ref, o_ref, acc_ref):
    ki = pl.program_id(4)

    @pl.when(ki == 0)
    def _():
        acc_ref[...] = jnp.zeros_like(acc_ref)

    acc_ref[...] += jnp.dot(x_ref[0], w_ref[0],
                            preferred_element_type=jnp.float32)

    @pl.when(ki == pl.num_programs(4) - 1)
    def _():
        o_ref[0, 0] = (acc_ref[...] + b_ref[0]).astype(o_ref.dtype)


def batched_linear(x, w, b, out_dtype):
    """x: (B, S, K); w: (P, K, N); b: (P, 1, N) -> (P, B, S, N)."""
    B, S, K = x.shape
    P, _, N = w.shape
    tm = _pick_tile(S, _ROW_TILES)
    tk = _pick_tile(K, _LANE_TILES)
    tn = _pick_tile(N, _LANE_TILES)
    grid = (P, B, S // tm, N // tn, K // tk)
    return pl.pallas_call(
        _linear_kernel,
        out_shape=jax.ShapeDtypeStruct((P, B, S, N), out_dtype),
        grid_spec=pltpu.PrefetchScalarGridSpec(
            num_scalar_prefetch=0,
            grid=grid,
            in_specs=[
                pl.BlockSpec((1, tm, tk), lambda p, bb, si, ni, ki: (bb, si, ki)),
                pl.BlockSpec((1, tk, tn), lambda p, bb, si, ni, ki: (p, ki, ni)),
                pl.BlockSpec((1, 1, tn), lambda p, bb, si, ni, ki: (p, 0, ni)),
            ],
            out_specs=pl.BlockSpec((1, 1, tm, tn),
                                   lambda p, bb, si, ni, ki: (p, bb, si, ni)),
            scratch_shapes=[pltpu.VMEM((tm, tn), jnp.float32)],
        ),
        compiler_params=pltpu.CompilerParams(
            dimension_semantics=("parallel", "parallel", "parallel",
                                 "parallel", "arbitrary")),
    )(x, w, b)


# ---------------------------------------------------------------------------
# Attention kernel (per head, full-S K/V slab, query tiled)
# ---------------------------------------------------------------------------
def _attn_body(q, k, v, bias, wts_ref, out_ref, exact):
    # scores: contract last dims of q (tq, D) and k (S, D) -> (tq, S); no k.T copy.
    s = lax.dot_general(q, k, (((1,), (1,)), ((), ())),
                        preferred_element_type=jnp.float32)
    if bias is not None:
        # Additive finite bias (0 / -1e9): one VPU add instead of cmp+select.
        # Masked entries still underflow to exactly 0 after exp(); fully-masked
        # rows become uniform rather than NaN (reference would give NaN).
        s = s + bias.astype(jnp.float32)
    m = jnp.max(s, axis=-1, keepdims=True)
    e = jnp.exp(s - m)
    denom = jnp.sum(e, axis=-1, keepdims=True)
    p = e * pl.reciprocal(denom, approx=not exact)   # EUP slot when approx
    wts_ref[0, 0] = p.astype(wts_ref.dtype)
    out_ref[0, 0] = jnp.dot(p.astype(v.dtype), v,
                            preferred_element_type=jnp.float32
                            ).astype(out_ref.dtype)


def _attn_kernel(q_ref, k_ref, v_ref, wts_ref, out_ref, *, exact):
    _attn_body(q_ref[0, 0], k_ref[0, 0], v_ref[0, 0], None,
               wts_ref, out_ref, exact)


def _attn_kernel_masked(q_ref, k_ref, v_ref, b_ref, wts_ref, out_ref, *, exact):
    _attn_body(q_ref[0, 0], k_ref[0, 0], v_ref[0, 0], b_ref[0],
               wts_ref, out_ref, exact)


def pallas_attention(q, k, v, bias):
    """q/k/v: (B, H, S, D); bias: None or (B, S, S) additive bf16 mask bias.

    Returns (attn_wts (B,H,S,S), attn_out (B,H,S,D))."""
    B, H, S, D = q.shape
    exact = (q.dtype == jnp.float32)
    wts_dtype = q.dtype
    in_b = q.dtype.itemsize
    wts_b = jnp.dtype(wts_dtype).itemsize
    mask_b = bias.dtype.itemsize if bias is not None else 0
    tq = _pick_attn_tq(S, D, in_b, wts_b, mask_b)

    out_shape = (
        jax.ShapeDtypeStruct((B, H, S, S), wts_dtype),   # attn_wts
        jax.ShapeDtypeStruct((B, H, S, D), q.dtype),     # per-head attn out
    )

    if bias is None:
        # Flattened (B*H) leading parallel axis (even megacore split on v7x);
        # K/V blocks stay resident across the query-tile axis.
        grid = (B * H, S // tq)
        in_specs = [
            pl.BlockSpec((1, 1, tq, D), lambda bh, qi: (bh // H, bh % H, qi, 0)),
            pl.BlockSpec((1, 1, S, D), lambda bh, qi: (bh // H, bh % H, 0, 0)),
            pl.BlockSpec((1, 1, S, D), lambda bh, qi: (bh // H, bh % H, 0, 0)),
        ]
        out_specs = [
            pl.BlockSpec((1, 1, tq, S), lambda bh, qi: (bh // H, bh % H, qi, 0)),
            pl.BlockSpec((1, 1, tq, D), lambda bh, qi: (bh // H, bh % H, qi, 0)),
        ]
        args = (q, k, v)
        kernel = functools.partial(_attn_kernel, exact=exact)
        sem = ("parallel", "parallel")
    else:
        # Head axis innermost so the (head-independent) bias block is NOT
        # re-fetched per head (its block index is constant across h steps).
        grid = (B, S // tq, H)
        in_specs = [
            pl.BlockSpec((1, 1, tq, D), lambda b, qi, h: (b, h, qi, 0)),
            pl.BlockSpec((1, 1, S, D), lambda b, qi, h: (b, h, 0, 0)),
            pl.BlockSpec((1, 1, S, D), lambda b, qi, h: (b, h, 0, 0)),
            pl.BlockSpec((1, tq, S), lambda b, qi, h: (b, qi, 0)),
        ]
        out_specs = [
            pl.BlockSpec((1, 1, tq, S), lambda b, qi, h: (b, h, qi, 0)),
            pl.BlockSpec((1, 1, tq, D), lambda b, qi, h: (b, h, qi, 0)),
        ]
        args = (q, k, v, bias)
        kernel = functools.partial(_attn_kernel_masked, exact=exact)
        sem = ("parallel", "parallel", "parallel")

    return pl.pallas_call(
        kernel,
        out_shape=out_shape,
        grid_spec=pltpu.PrefetchScalarGridSpec(
            num_scalar_prefetch=0,
            grid=grid,
            in_specs=in_specs,
            out_specs=out_specs,
        ),
        compiler_params=pltpu.CompilerParams(dimension_semantics=sem),
    )(*args)


# ---------------------------------------------------------------------------
# One-time host-side weight packing (outside the forward / jit)
# ---------------------------------------------------------------------------
def pack_params(params, num_head, eye_is_identity=False):
    """Fold eye_linear (shared) and 1/sqrt(D) into the Q/K weights and pack
    everything for y = x @ W + b GEMMs.  Runs ONCE, not per forward call."""
    hidden = params["wq"].shape[0]
    D = hidden // num_head
    scale = 1.0 / (D ** 0.5)
    w_eye = None if eye_is_identity else params["w_eye"]   # identity -> no-op fold

    def fold_w(wt):                                 # wt = W.T, shape (hidden, hidden)
        if w_eye is None:
            return wt
        return jnp.einsum("ihd,ed->ihe",
                          wt.reshape(hidden, num_head, D), w_eye
                          ).reshape(hidden, hidden)

    def fold_b(b):
        if w_eye is None:
            return b
        return (b.reshape(num_head, D) @ w_eye.T).reshape(hidden)

    wq = fold_w(params["wq"].T) * scale
    bq = fold_b(params["bq"]) * scale
    wk = fold_w(params["wk"].T)
    bk = fold_b(params["bk"])
    wv = params["wv"].T
    bv = params["bv"]

    return dict(
        wqkv=jnp.stack([wq, wk, wv], axis=0),            # (3, hidden, hidden)
        bqkv=jnp.stack([bq, bk, bv], axis=0)[:, None],    # (3, 1, hidden)  (f32)
        wo=params["wo"].T[None],                          # (1, hidden, hidden)
        bo=params["bo"][None, None],                      # (1, 1, hidden)  (f32)
    )


# ---------------------------------------------------------------------------
# Module forward
# ---------------------------------------------------------------------------
def multi_head_attention(packed, query, key, value, mask, num_head,
                         compute_dtype=jnp.float32):
    """Self-attention configuration (query == key == value); only `query` is read."""
    del key, value  # self_attn=True: identical to query (asserted in torch module)
    B, S, hidden = query.shape
    D = hidden // num_head

    x = query.astype(compute_dtype)

    # Fused Q/K/V projection: lane-dense GEMM, heads packed along hidden.
    qkv = batched_linear(x, packed["wqkv"].astype(compute_dtype),
                         packed["bqkv"], out_dtype=compute_dtype)   # (3,B,S,hidden)

    # Head split (XLA relayout; small next to the S^2 attention streams).
    qkv_h = qkv.reshape(3, B, S, num_head, D).transpose(0, 1, 3, 2, 4)
    q, k, v = qkv_h[0], qkv_h[1], qkv_h[2]                           # (B,H,S,D)

    if mask is None:
        bias = None
    else:
        # TODO(synk): per-head-varying masks are collapsed to head 0 (standard
        # padding/causal masks are head-independent, matching torch semantics).
        m3 = jnp.broadcast_to(jnp.asarray(mask), (B, num_head, S, S))[:, 0]
        bias = jnp.where(m3 == 0, -1e9, 0.0).astype(jnp.bfloat16)    # (B,S,S)

    attn_wts, attn_h = pallas_attention(q, k, v, bias)

    # Merge heads (XLA relayout) and run the output projection as one big GEMM
    # contracting the full hidden axis in wide K chunks.
    ctx = attn_h.transpose(0, 2, 1, 3).reshape(B, S, hidden)
    attn_out = batched_linear(ctx, packed["wo"].astype(compute_dtype),
                              packed["bo"], out_dtype=jnp.float32)[0]
    return attn_wts, attn_out


# ---------------------------------------------------------------------------
# Parameter init (nn.Linear-style) and pure-JAX reference
# ---------------------------------------------------------------------------
def init_params(key, hidden_dim, num_head):
    head_dim = hidden_dim // num_head
    ks = jax.random.split(key, 8)
    bound = 1.0 / (hidden_dim ** 0.5)

    def lin(kw, kb):
        w = jax.random.uniform(kw, (hidden_dim, hidden_dim), jnp.float32, -bound, bound)
        b = jax.random.uniform(kb, (hidden_dim,), jnp.float32, -bound, bound)
        return w, b

    wq, bq = lin(ks[0], ks[1])
    wk, bk = lin(ks[2], ks[3])
    wv, bv = lin(ks[4], ks[5])
    wo, bo = lin(ks[6], ks[7])
    w_eye = jnp.eye(head_dim, dtype=jnp.float32)   # random_init=False -> identity
    return dict(wq=wq, bq=bq, wk=wk, bk=bk, wv=wv, bv=bv, wo=wo, bo=bo, w_eye=w_eye)


def reference(params, x, mask, num_head):
    B, S, hidden = x.shape
    D = hidden // num_head

    def lin(a, w, b):
        return a @ w.T + b

    def split(y):
        return y.reshape(B, S, num_head, D).transpose(0, 2, 1, 3)

    q = split(lin(x, params["wq"], params["bq"]))
    k = split(lin(x, params["wk"], params["bk"]))
    v = split(lin(x, params["wv"], params["bv"]))
    q = q @ params["w_eye"].T
    k = k @ params["w_eye"].T
    s = (q @ jnp.swapaxes(k, 2, 3)) / (D ** 0.5)
    if mask is not None:
        s = jnp.where(jnp.broadcast_to(mask, s.shape) == 0, -jnp.inf, s)
    p = jax.nn.softmax(s, axis=-1)
    o = (p @ v).transpose(0, 2, 1, 3).reshape(B, S, hidden)
    o = lin(o, params["wo"], params["bo"])
    return p, o


if __name__ == "__main__":
    B, S, hidden, num_head = 2, 8, 32, 4
    key0 = jax.random.PRNGKey(0)
    kp, kx = jax.random.split(key0)

    params = init_params(kp, hidden, num_head)
    packed = pack_params(params, num_head, eye_is_identity=True)  # one-time
    x = jax.random.normal(kx, (B, S, hidden), dtype=jnp.float32)

    # 1) float32, no mask
    wts, out = multi_head_attention(packed, x, x, x, None, num_head)
    jax.block_until_ready((wts, out))
    rw, ro = reference(params, x, None, num_head)
    assert wts.shape == (B, num_head, S, S)
    assert out.shape == (B, S, hidden)
    assert jnp.allclose(wts, rw, atol=5e-5, rtol=5e-5)
    assert jnp.allclose(out, ro, atol=5e-5, rtol=5e-5)

    # 2) float32, causal mask (compact (S, S) mask broadcast over batch/heads)
    causal = jnp.tril(jnp.ones((S, S), jnp.int32)).reshape(1, 1, S, S)
    wts_m, out_m = multi_head_attention(packed, x, x, x, causal, num_head)
    jax.block_until_ready((wts_m, out_m))
    rw_m, ro_m = reference(params, x, causal, num_head)
    assert jnp.allclose(wts_m, rw_m, atol=5e-5, rtol=5e-5)
    assert jnp.allclose(out_m, ro_m, atol=5e-5, rtol=5e-5)

    # 3) bf16 compute path (MXU-friendly; f32 accumulation / softmax statistics)
    wts_b, out_b = multi_head_attention(packed, x, x, x, None, num_head,
                                        compute_dtype=jnp.bfloat16)
    jax.block_until_ready((wts_b, out_b))
    assert jnp.allclose(wts_b.astype(jnp.float32), rw, atol=1e-1, rtol=1e-1)
    assert jnp.allclose(out_b.astype(jnp.float32), ro, atol=1e-1, rtol=1e-1)

    print("KERNEL_OK")
</pallas_src>

<mosaic_0001>
module attributes {stable_mosaic.version = 11 : i64} {
  func.func @_linear_kernel(%arg0: i32, %arg1: i32, %arg2: i32, %arg3: i32, %arg4: i32, %arg5: memref<1x8x32xf32, #tpu.memory_space<vmem>>, %arg6: memref<1x32x32xf32, #tpu.memory_space<vmem>>, %arg7: memref<1x1x32xf32, #tpu.memory_space<vmem>>, %arg8: memref<1x1x8x32xf32, #tpu.memory_space<vmem>>, %arg9: memref<8x32xf32, #tpu.memory_space<vmem>>) attributes {dimension_semantics = [#tpu.dimension_semantics<parallel>, #tpu.dimension_semantics<parallel>, #tpu.dimension_semantics<parallel>, #tpu.dimension_semantics<parallel>, #tpu.dimension_semantics<arbitrary>], iteration_bounds = array<i64: 3, 2, 1, 1, 1>, scalar_prefetch = 0 : i64, scratch_operands = 1 : i64, tpu.core_type = #tpu.core_type<tc>, window_params = [{transform_indices = @transform_0, window_bounds = array<i64: 1, 8, 32>}, {transform_indices = @transform_1, window_bounds = array<i64: 1, 32, 32>}, {transform_indices = @transform_2, window_bounds = array<i64: 1, 1, 32>}, {transform_indices = @transform_3, window_bounds = array<i64: 1, 1, 8, 32>}]} {
    %c0_i32 = arith.constant 0 : i32
    %0 = arith.cmpi eq, %arg4, %c0_i32 : i32
    %1 = arith.extui %0 : i1 to i32
    %c0_i32_0 = arith.constant 0 : i32
    %2 = arith.cmpi ne, %1, %c0_i32_0 : i32
    scf.if %2 {
      %cst_12 = arith.constant 0.000000e+00 : f32
      %14 = vector.broadcast %cst_12 : f32 to vector<8x32xf32>
      %c0_13 = arith.constant 0 : index
      %c0_14 = arith.constant 0 : index
      %15 = vector.load %arg9[%c0_13, %c0_14] : memref<8x32xf32, #tpu.memory_space<vmem>>, vector<8x32xf32>
      tpu.vector_store %arg9[%c0_13, %c0_14], %14 {strides = array<i32>} : memref<8x32xf32, #tpu.memory_space<vmem>>, vector<8x32xf32>,
    } else {
    }
    %c0 = arith.constant 0 : index
    %c0_1 = arith.constant 0 : index
    %3 = vector.load %arg9[%c0, %c0_1] : memref<8x32xf32, #tpu.memory_space<vmem>>, vector<8x32xf32>
    %c0_2 = arith.constant 0 : index
    %c0_3 = arith.constant 0 : index
    %c0_4 = arith.constant 0 : index
    %4 = vector.load %arg5[%c0_2, %c0_3, %c0_4] : memref<1x8x32xf32, #tpu.memory_space<vmem>>, vector<1x8x32xf32>
    %5 = vector.shape_cast %4 : vector<1x8x32xf32> to vector<8x32xf32>
    %c0_5 = arith.constant 0 : index
    %c0_6 = arith.constant 0 : index
    %c0_7 = arith.constant 0 : index
    %6 = vector.load %arg6[%c0_5, %c0_6, %c0_7] : memref<1x32x32xf32, #tpu.memory_space<vmem>>, vector<1x32x32xf32>
    %7 = vector.shape_cast %6 : vector<1x32x32xf32> to vector<32x32xf32>
    %cst = arith.constant dense<0.000000e+00> : vector<8x32xf32>
    %8 = tpu.matmul %5, %7, %cst {dimension_numbers = #tpu.dot_dimension_numbers<[1], [0], [0], [1], [0, 0, 1, 1], [], []>} : vector<8x32xf32>, vector<32x32xf32>, vector<8x32xf32> -> vector<8x32xf32>
    %9 = arith.addf %3, %8 : vector<8x32xf32>
    %c0_8 = arith.constant 0 : index
    %c0_9 = arith.constant 0 : index
    %10 = vector.load %arg9[%c0_8, %c0_9] : memref<8x32xf32, #tpu.memory_space<vmem>>, vector<8x32xf32>
    tpu.vector_store %arg9[%c0_8, %c0_9], %9 {strides = array<i32>} : memref<8x32xf32, #tpu.memory_space<vmem>>, vector<8x32xf32>,
    %c0_i32_10 = arith.constant 0 : i32
    %11 = arith.cmpi eq, %arg4, %c0_i32_10 : i32
    %12 = arith.extui %11 : i1 to i32
    %c0_i32_11 = arith.constant 0 : i32
    %13 = arith.cmpi ne, %12, %c0_i32_11 : i32
    scf.if %13 {
      %c0_12 = arith.constant 0 : index
      %c0_13 = arith.constant 0 : index
      %14 = vector.load %arg9[%c0_12, %c0_13] : memref<8x32xf32, #tpu.memory_space<vmem>>, vector<8x32xf32>
      %c0_14 = arith.constant 0 : index
      %c0_15 = arith.constant 0 : index
      %c0_16 = arith.constant 0 : index
      %15 = vector.load %arg7[%c0_14, %c0_15, %c0_16] : memref<1x1x32xf32, #tpu.memory_space<vmem>>, vector<1x1x32xf32>
      %16 = vector.shape_cast %15 : vector<1x1x32xf32> to vector<1x32xf32>
      %17 = vector.broadcast %16 : vector<1x32xf32> to vector<8x32xf32>
      %18 = arith.addf %14, %17 : vector<8x32xf32>
      %c0_17 = arith.constant 0 : index
      %c0_18 = arith.constant 0 : index
      %c0_19 = arith.constant 0 : index
      %c0_20 = arith.constant 0 : index
      %19 = vector.load %arg8[%c0_17, %c0_18, %c0_19, %c0_20] : memref<1x1x8x32xf32, #tpu.memory_space<vmem>>, vector<1x1x8x32xf32>
      %20 = vector.shape_cast %19 : vector<1x1x8x32xf32> to vector<8x32xf32>
      %21 = vector.shape_cast %18 : vector<8x32xf32> to vector<1x1x8x32xf32>
      tpu.vector_store %arg8[%c0_17, %c0_18, %c0_19, %c0_20], %21 {strides = array<i32>} : memref<1x1x8x32xf32, #tpu.memory_space<vmem>>, vector<1x1x8x32xf32>,
    } else {
    }
    return
  }
  func.func @transform_0(%arg0: i32, %arg1: i32, %arg2: i32, %arg3: i32, %arg4: i32) -> (i32, i32, i32) {
    %c0_i32 = arith.constant 0 : i32
    return %arg1, %arg2, %arg4 : i32, i32, i32
  }
  func.func @transform_1(%arg0: i32, %arg1: i32, %arg2: i32, %arg3: i32, %arg4: i32) -> (i32, i32, i32) {
    %c0_i32 = arith.constant 0 : i32
    return %arg0, %arg4, %arg3 : i32, i32, i32
  }
  func.func @transform_2(%arg0: i32, %arg1: i32, %arg2: i32, %arg3: i32, %arg4: i32) -> (i32, i32, i32) {
    %c0_i32 = arith.constant 0 : i32
    %c0_i32_0 = arith.constant 0 : i32
    return %arg0, %c0_i32, %arg3 : i32, i32, i32
  }
  func.func @transform_3(%arg0: i32, %arg1: i32, %arg2: i32, %arg3: i32, %arg4: i32) -> (i32, i32, i32, i32) {
    %c0_i32 = arith.constant 0 : i32
    return %arg0, %arg1, %arg2, %arg3 : i32, i32, i32, i32
  }
}

</mosaic_0001>

<llo_original>
// kernel: tpu_custom_call.1
$region0: #{tpu_custom_call.1}
  #allocation0 [shape = 'u32[]', space=smem, size = 0x4, offset = 0x4, fixed_abs, tag = 'smem constant byte address 0x4 - core index']
  #allocation1 [shape = 'u32[144,128]{1,0:T(1,128)}', space=vmem, size = 0x12000, scoped, tag = 'internal scratch']
  #allocation2 [shape = 'f32[8,32]{1,0:T(8,128)}', space=vmem, size = 0x1000, scoped, tag = 'scratch operand']
  %s0 = inlined_call_operand.hbm [shape: f32[2,8,32], index: 0, kind: input, shape index: {}]
  %s1 = inlined_call_operand.hbm [shape: f32[3,32,32], index: 1, kind: input, shape index: {}]
  %s2 = inlined_call_operand.vmem [shape: f32[3,1,32], index: 2, kind: input, shape index: {}]
  %s3 = inlined_call_operand.hbm [shape: f32[3,2,8,32], index: 3, kind: output, shape index: {}]
  %s4 = sld [smem:[#allocation0]]
  $region61: #{tpu_custom_call.1} parent=0
    _
  %s6 = ssub.s32 1, %s4
  %s7 = scalar_select 0, %s6, %s4
  $region1: #{tpu_custom_call.1} parent=0
    #allocation3 [shape = 'u8[8192]{0}', space=vmem, size = 0x2000, scoped, tag = 'input window, operand 0']
    #allocation4 [shape = 's32[2]{0}', space=sflag, size = 0x8, scoped, tag = 'scoped memory for tpu_custom_call.1']
    #allocation5 [shape = 's32[2]{0}', space=sflag, size = 0x8, scoped, tag = 'scoped memory for tpu_custom_call.1']
    #allocation6 [shape = 'u8[32768]{0}', space=vmem, size = 0x8000, scoped, tag = 'input window, operand 1']
    #allocation7 [shape = 's32[2]{0}', space=sflag, size = 0x8, scoped, tag = 'scoped memory for tpu_custom_call.1']
    #allocation8 [shape = 'u8[8192]{0}', space=vmem, size = 0x2000, scoped, tag = 'output window, operand 0']
    %8 = vsyncpa [#allocation4], 0
    %s9 = scalar_lea.sflag [#allocation4], 1
    %10 = vsyncpa %s9, 0
    %11 = vsyncpa [#allocation7], 0
    %s12 = scalar_lea.sflag [#allocation7], 1
    %13 = vsyncpa %s12, 0
    %14 = vsyncpa [#allocation5], 0
    %s15 = scalar_lea.sflag [#allocation5], 1
    %16 = vsyncpa %s15, 0
    loop: start=0, step=1, limit=8
    $region2: #{tpu_custom_call.1} parent=1 // loop_pre_header
      _
    $region3: #{tpu_custom_call.1} parent=1 // loop_header
      %s18 = sphi 0, %s22
      %p19 = scmp.ge.s32.totalorder %s18, 8
      %s25 = sphi 0, %s58
      %s26 = sphi 0, %s54
      %s27 = sphi 0, %s50
      %s28 = sphi 0, %s46
      %s29 = sphi 0, %s42
      %s30 = sphi 0, %s25
      %s31 = sphi 0, %s26
      %s32 = sphi 0, %s27
      %s33 = sphi 0, %s28
      %s34 = sphi 0, %s29
      %s35 = sphi 0, %s30
      %s36 = sphi 0, %s31
      %s37 = sphi 0, %s32
      %s38 = sphi 0, %s33
      %s39 = sphi 0, %s34
      %s65 = sphi 0, %s67
      %s68 = sphi 0, %s65
      %s69 = sphi 0, %s68
      %s85 = sphi 0, %s69
      %s95 = sphi 0, %s97
      %s98 = sphi 0, %s95
      %s99 = sphi 0, %s98
      %s115 = sphi 0, %s99
      %s123 = sphi 0, %s125
      %s126 = sphi 0, %s123
      %s127 = sphi 0, %s126
      %s143 = sphi 0, %s127
      %s155 = sphi 0, %s157
      %s158 = sphi 0, %s155
      %s159 = sphi 0, %s158
      %s175 = sphi 0, %s159
    $region4: #{tpu_custom_call.1} parent=1 // loop_header_branch
      %21 = sbr.rel (%p19) target = $region8
    $region5: #{tpu_custom_call.1} parent=1 // loop_body
      %s23 = ssub.s32 %s18, 1
      %s24 = ssub.s32 %s18, 2
      %s40 = sadd.s32 1, %s29
      %p41 = scmp.ge.s32.totalorder %s40, 1
      %s42 = scalar_select %p41, 0, %s40
      %s43 = sadd.s32 1, %s28
      %s44 = scalar_select %p41, %s43, %s28
      %p45 = scmp.ge.s32.totalorder %s44, 1
      %s46 = scalar_select %p45, 0, %s44
      %s47 = sadd.s32 1, %s27
      %s48 = scalar_select %p45, %s47, %s27
      %p49 = scmp.ge.s32.totalorder %s48, 1
      %s50 = scalar_select %p49, 0, %s48
      %s51 = sadd.s32 1, %s26
      %s52 = scalar_select %p49, %s51, %s26
      %p53 = scmp.ge.s32.totalorder %s52, 2
      %s54 = scalar_select %p53, 0, %s52
      %s55 = sadd.s32 1, %s25
      %s56 = scalar_select %p53, %s55, %s25
      %p57 = scmp.ge.s32.totalorder %s56, 3
      %s58 = scalar_select %p57, 0, %s56
      %s59 = ssub.s32 %s26, %s54
      %s60 = ssub.s32 %s27, %s50
      %s61 = sor.u32 %s59, %s60
      %s62 = ssub.s32 %s29, %s42
      %s63 = sor.u32 %s61, %s62
      %p64 = scmp.eq.s32.totalorder %s63, 0
      %s66 = sadd.s32 %s65, 1
      %s67 = scalar_select %p64, %s65, %s66
      %p70 = pneg %p64
      %p71 = scmp.eq.s32.totalorder %s18, 5
      %p72 = por %p70, %p71
      %p73 = scmp.ne.s32.totalorder %s65, %s68
      %p74 = scmp.eq.s32.totalorder %s18, 0
      %p75 = por %p73, %p74
      %p76 = scmp.ne.s32.totalorder %s65, %s68
      %p77 = scmp.eq.s32.totalorder %s23, 5
      %p78 = por %p76, %p77
      %p79 = scmp.ne.s32.totalorder %s68, %s69
      %p80 = scmp.eq.s32.totalorder %s23, 0
      %p81 = por %p79, %p80
      %p82 = scmp.ne.s32.totalorder %s68, %s69
      %p83 = scmp.eq.s32.totalorder %s24, 5
      %p84 = por %p82, %p83
      %p86 = scmp.ne.s32.totalorder %s69, %s85
      %p87 = scmp.eq.s32.totalorder %s24, 0
      %p88 = por %p86, %p87
      %s89 = ssub.s32 %s25, %s58
      %s90 = ssub.s32 %s29, %s42
      %s91 = sor.u32 %s89, %s90
      %s92 = ssub.s32 %s28, %s46
      %s93 = sor.u32 %s91, %s92
      %p94 = scmp.eq.s32.totalorder %s93, 0
      %s96 = sadd.s32 %s95, 1
      %s97 = scalar_select %p94, %s95, %s96
      %p100 = pneg %p94
      %p101 = scmp.eq.s32.totalorder %s18, 5
      %p102 = por %p100, %p101
      %p103 = scmp.ne.s32.totalorder %s95, %s98
      %p104 = scmp.eq.s32.totalorder %s18, 0
      %p105 = por %p103, %p104
      %p106 = scmp.ne.s32.totalorder %s95, %s98
      %p107 = scmp.eq.s32.totalorder %s23, 5
      %p108 = por %p106, %p107
      %p109 = scmp.ne.s32.totalorder %s98, %s99
      %p110 = scmp.eq.s32.totalorder %s23, 0
      %p111 = por %p109, %p110
      %p112 = scmp.ne.s32.totalorder %s98, %s99
      %p113 = scmp.eq.s32.totalorder %s24, 5
      %p114 = por %p112, %p113
      %p116 = scmp.ne.s32.totalorder %s99, %s115
      %p117 = scmp.eq.s32.totalorder %s24, 0
      %p118 = por %p116, %p117
      %s119 = ssub.s32 %s25, %s58
      %s120 = ssub.s32 %s28, %s46
      %s121 = sor.u32 %s119, %s120
      %p122 = scmp.eq.s32.totalorder %s121, 0
      %s124 = sadd.s32 %s123, 1
      %s125 = scalar_select %p122, %s123, %s124
      %p128 = pneg %p122
      %p129 = scmp.eq.s32.totalorder %s18, 5
      %p130 = por %p128, %p129
      %p131 = scmp.ne.s32.totalorder %s123, %s126
      %p132 = scmp.eq.s32.totalorder %s18, 0
      %p133 = por %p131, %p132
      %p134 = scmp.ne.s32.totalorder %s123, %s126
      %p135 = scmp.eq.s32.totalorder %s23, 5
      %p136 = por %p134, %p135
      %p137 = scmp.ne.s32.totalorder %s126, %s127
      %p138 = scmp.eq.s32.totalorder %s23, 0
      %p139 = por %p137, %p138
      %p140 = scmp.ne.s32.totalorder %s126, %s127
      %p141 = scmp.eq.s32.totalorder %s24, 5
      %p142 = por %p140, %p141
      %p144 = scmp.ne.s32.totalorder %s127, %s143
      %p145 = scmp.eq.s32.totalorder %s24, 0
      %p146 = por %p144, %p145
      %s147 = ssub.s32 %s25, %s58
      %s148 = ssub.s32 %s26, %s54
      %s149 = sor.u32 %s147, %s148
      %s150 = ssub.s32 %s27, %s50
      %s151 = sor.u32 %s149, %s150
      %s152 = ssub.s32 %s28, %s46
      %s153 = sor.u32 %s151, %s152
      %p154 = scmp.eq.s32.totalorder %s153, 0
      %s156 = sadd.s32 %s155, 1
      %s157 = scalar_select %p154, %s155, %s156
      %p160 = pneg %p154
      %p161 = scmp.eq.s32.totalorder %s18, 5
      %p162 = por %p160, %p161
      %p163 = scmp.ne.s32.totalorder %s155, %s158
      %p164 = scmp.eq.s32.totalorder %s18, 0
      %p165 = por %p163, %p164
      %p166 = scmp.ne.s32.totalorder %s155, %s158
      %p167 = scmp.eq.s32.totalorder %s23, 5
      %p168 = por %p166, %p167
      %p169 = scmp.ne.s32.totalorder %s158, %s159
      %p170 = scmp.eq.s32.totalorder %s23, 0
      %p171 = por %p169, %p170
      %p172 = scmp.ne.s32.totalorder %s158, %s159
      %p173 = scmp.eq.s32.totalorder %s24, 5
      %p174 = por %p172, %p173
      %p176 = scmp.ne.s32.totalorder %s159, %s175
      %p177 = scmp.eq.s32.totalorder %s24, 0
      %p178 = por %p176, %p177
      %p179 = scmp.le.s32.totalorder 1, %s18
      %p180 = scmp.lt.s32.totalorder %s18, 7
      %p181 = pnand %p179, %p180
      %p182 = pneg %p181
      // Predicated region
      $region9: #{tpu_custom_call.1} parent=5 // pred_check
        _
      $region10: #{tpu_custom_call.1} parent=5 // pred_check_branch
        %184 = sbr.rel (%p181) target = $region12
      $region11: #{tpu_custom_call.1} parent=5 // pred_region
        %s185 = ssub.s32 %s18, 1
      $region12: #{tpu_custom_call.1} parent=5 // pred_fallthru
        _
      %p186 = scmp.lt.s32.totalorder %s18, 6
      // Predicated region
      $region13: #{tpu_custom_call.1} parent=5 // pred_check
        %p187 = pneg %p186
      $region14: #{tpu_custom_call.1} parent=5 // pred_check_branch
        %189 = sbr.rel (%p187) target = $region16
      $region15: #{tpu_custom_call.1} parent=5 // pred_region
        // Predicated region
        $region17: #{tpu_custom_call.1} parent=15 // pred_check
          %p190 = pneg %p75
        $region18: #{tpu_custom_call.1} parent=15 // pred_check_branch
          %192 = sbr.rel (%p190) target = $region20
        $region19: #{tpu_custom_call.1} parent=15 // pred_region
          %s193 = sand.u32 %s65, 1
          %s194 = scalar_lea.sflag [#allocation4], %s193
          %s195 = sand.u32 %s65, 1
          %s196 = smul.addr %s195, 8
          %s197 = scalar_lea.vmem [#allocation3], %s196
          %s199 = ssub.s32 128, 128
          %200 = vsyncadd %s194, %s199
          %s201 = sadd.s32 %s29, %s27
          %s202 = sadd.s32 %s201, %s26
          %s203 = smul.addr %s202, 128
          %s204 = scalar_lea.hbm %s0, %s203
          %s206 = sshll.u32 %s197, 4
          %s207 = int_to_ptr.vmem [resolvable:$true] %s206
          %209 = dma.hbm_to_vmem [thread:$0]  %s204, 128, %s207, %s194
        $region20: #{tpu_custom_call.1} parent=15 // pred_fallthru
          _
        // Predicated region
        $region21: #{tpu_custom_call.1} parent=15 // pred_check
          %p210 = pneg %p105
        $region22: #{tpu_custom_call.1} parent=15 // pred_check_branch
          %212 = sbr.rel (%p210) target = $region24
        $region23: #{tpu_custom_call.1} parent=15 // pred_region
          %s213 = sand.u32 %s95, 1
          %s214 = scalar_lea.sflag [#allocation7], %s213
          %s215 = sand.u32 %s95, 1
          %s216 = smul.addr %s215, 32
          %s217 = scalar_lea.vmem [#allocation6], %s216
          %s218 = smul.u32 4, %s29
          %s220 = ssub.s32 512, 512
          %221 = vsyncadd %s214, %s220
          %s222 = sadd.s32 %s28, %s218
          %s223 = smul.addr %s25, 4
          %s224 = sadd.s32 %s222, %s223
          %s225 = smul.addr %s224, 128
          %s226 = scalar_lea.hbm %s1, %s225
          %s227 = sshll.u32 %s217, 4
          %s228 = int_to_ptr.vmem [resolvable:$true] %s227
          %233 = dma.hbm_to_vmem [thread:$0]  %s226, 512, %s228, %s214, 128, 128, 8
        $region24: #{tpu_custom_call.1} parent=15 // pred_fallthru
          _
        // Predicated region
        $region25: #{tpu_custom_call.1} parent=15 // pred_check
          %p234 = pneg %p133
        $region26: #{tpu_custom_call.1} parent=15 // pred_check_branch
          %236 = sbr.rel (%p234) target = $region28
        $region27: #{tpu_custom_call.1} parent=15 // pred_region
          %p237 = scmp.lt.s32.totalorder %s25, 2
          %s238 = scalar_select %p237, %s25, 2
          %p239 = scmp.lt.s32.totalorder %s28, 0
          %s240 = scalar_select %p239, %s28, 0
          %s241 = sadd.s32 %s240, %s238
          %s242 = scalar_lea.vmem %s2, %s241
        $region28: #{tpu_custom_call.1} parent=15 // pred_fallthru
          _
      $region16: #{tpu_custom_call.1} parent=5 // pred_fallthru
        _
      %p243 = scmp.le.s32.totalorder 1, %s18
      %p244 = scmp.lt.s32.totalorder %s18, 7
      %p245 = pnand %p243, %p244
      %p246 = pneg %p245
      // Predicated region
      $region29: #{tpu_custom_call.1} parent=5 // pred_check
        _
      $region30: #{tpu_custom_call.1} parent=5 // pred_check_branch
        %248 = sbr.rel (%p245) target = $region32
      $region31: #{tpu_custom_call.1} parent=5 // pred_region
        %s249 = ssub.s32 %s18, 1
        %s250 = sand.u32 %s68, 1
        %s251 = scalar_lea.sflag [#allocation4], %s250
        %s252 = sand.u32 %s68, 1
        %s253 = smul.addr %s252, 8
        %s254 = scalar_lea.vmem [#allocation3], %s253
        // Predicated region
        $region33: #{tpu_custom_call.1} parent=31 // pred_check
          %p255 = pneg %p81
        $region34: #{tpu_custom_call.1} parent=31 // pred_check_branch
          %257 = sbr.rel (%p255) target = $region36
        $region35: #{tpu_custom_call.1} parent=31 // pred_region
          %258 = dma.done %s251, 128
        $region36: #{tpu_custom_call.1} parent=31 // pred_fallthru
          _
        %s259 = sand.u32 %s98, 1
        %s260 = scalar_lea.sflag [#allocation7], %s259
        %s261 = sand.u32 %s98, 1
        %s262 = smul.addr %s261, 32
        %s263 = scalar_lea.vmem [#allocation6], %s262
        // Predicated region
        $region37: #{tpu_custom_call.1} parent=31 // pred_check
          %p264 = pneg %p111
        $region38: #{tpu_custom_call.1} parent=31 // pred_check_branch
          %266 = sbr.rel (%p264) target = $region40
        $region39: #{tpu_custom_call.1} parent=31 // pred_region
          %267 = dma.done %s260, 512
        $region40: #{tpu_custom_call.1} parent=31 // pred_fallthru
          _
        %s268 = sand.u32 %s68, 1
        %s269 = scalar_lea.sflag [#allocation4], %s268
        %s270 = sand.u32 %s68, 1
        %s271 = smul.addr %s270, 8
        %s272 = scalar_lea.vmem [#allocation3], %s271
        %p273 = pneg %p81
        %p274 = pneg %p78
        %s275 = sand.u32 %s98, 1
        %s276 = scalar_lea.sflag [#allocation7], %s275
        %s277 = sand.u32 %s98, 1
        %s278 = smul.addr %s277, 32
        %s279 = scalar_lea.vmem [#allocation6], %s278
        %p280 = pneg %p111
        %p281 = pneg %p108
        %p282 = scmp.lt.s32.totalorder %s30, 2
        %s283 = scalar_select %p282, %s30, 2
        %p284 = scmp.lt.s32.totalorder %s33, 0
        %s285 = scalar_select %p284, %s33, 0
        %s286 = sadd.s32 %s285, %s283
        %s287 = scalar_lea.vmem %s2, %s286
        %p288 = pneg %p139
        %p289 = pneg %p136
        %p290 = pneg %p171
        %p291 = pneg %p168
        %s292 = sand.u32 %s158, 1
        %s293 = scalar_lea.sflag [#allocation5], %s292
        %s294 = sand.u32 %s158, 1
        %s295 = smul.addr %s294, 8
        %s296 = scalar_lea.vmem [#allocation8], %s295
        %s297 = smul.u32 4, %s34
        %p298 = scmp.lt.s32.totalorder %s30, 2
        %s299 = scalar_select %p298, %s30, 2
        %p300 = scmp.lt.s32.totalorder %s33, 0
        %s301 = scalar_select %p300, %s33, 0
        %s302 = sadd.s32 %s301, %s299
        %s303 = scalar_lea.vmem %s2, %s302
        %p304 = scmp.eq.s32.totalorder %s34, 0
        // Predicated region
        $region41: #{tpu_custom_call.1} parent=31 // pred_check
          %p305 = pneg %p304
        $region42: #{tpu_custom_call.1} parent=31 // pred_check_branch
          %307 = sbr.rel (%p305) target = $region44
        $region43: #{tpu_custom_call.1} parent=31 // pred_region
          %vm308 = vcmask 261120
          %309 = vst.msk [vmem:[#allocation2] sm:$0xff] %vm308, 0.0
        $region44: #{tpu_custom_call.1} parent=31 // pred_fallthru
          _
        %v310 = vld [vmem:[#allocation2] sm:$0xff]
        %v311 = vld [vmem:[%s254] sm:$0xff]
        %v312 = vld [vmem:[%s263] sm:$0xff]
        %v313 = vld [vmem:[%s263 + $0x8] sm:$0xff]
        %v314 = vld [vmem:[%s263 + $0x10] sm:$0xff]
        %v315 = vld [vmem:[%s263 + $0x18] sm:$0xff]
        %vm316 = vcmask 261120
        %v318 = vsel %vm316, %v311, 0
        %320 = vmatprep.subr.mxu0 0.0
        %321 = vmatpush1.msra.mxu0 0.0
        %322 = vmatprep.subr.mxu0 0.0
        %323 = vmatpush1.msra.mxu0 0.0
        %324 = vmatprep.subr.mxu0 0.0
        %325 = vmatpush1.msra.mxu0 0.0
        %326 = vmatprep.subr.mxu0 0.0
        %327 = vmatpush1.msra.mxu0 0.0
        %328 = vmatprep.subr.mxu0 0.0
        %329 = vmatpush1.msra.mxu0 0.0
        %330 = vmatprep.subr.mxu0 0.0
        %331 = vmatpush1.msra.mxu0 0.0
        %332 = vmatprep.subr.mxu0 0.0
        %333 = vmatpush1.msra.mxu0 0.0
        %334 = vmatprep.subr.mxu0 0.0
        %335 = vmatpush1.msra.mxu0 0.0
        %336 = vmatprep.subr.mxu0 0.0
        %337 = vmatpush1.msra.mxu0 0.0
        %338 = vmatprep.subr.mxu0 0.0
        %339 = vmatpush1.msra.mxu0 0.0
        %340 = vmatprep.subr.mxu0 0.0
        %341 = vmatpush1.msra.mxu0 0.0
        %342 = vmatprep.subr.mxu0 0.0
        %343 = vmatpush1.msra.mxu0 0.0
        %344 = vmatprep.subr.mxu0 0.0
        %345 = vmatpush1.msra.mxu0 %v315
        %346 = vmatprep.subr.mxu0 0.0
        %347 = vmatpush1.msra.mxu0 %v314
        %348 = vmatprep.subr.mxu0 0.0
        %349 = vmatpush1.msra.mxu0 %v313
        %350 = vmatprep.subr.mxu0 0.0
        %351 = vmatpush1.msra.mxu0 %v312
        %352 = vmatprep.subr.mxu0 0.0
        %353 = vmatpush2.msra.mxu0 0.0
        %354 = vmatprep.subr.mxu0 0.0
        %355 = vmatpush2.msra.mxu0 0.0
        %356 = vmatprep.subr.mxu0 0.0
        %357 = vmatpush2.msra.mxu0 0.0
        %358 = vmatprep.subr.mxu0 0.0
        %359 = vmatpush2.msra.mxu0 0.0
        %360 = vmatprep.subr.mxu0 0.0
        %361 = vmatpush2.msra.mxu0 0.0
        %362 = vmatprep.subr.mxu0 0.0
        %363 = vmatpush2.msra.mxu0 0.0
        %364 = vmatprep.subr.mxu0 0.0
        %365 = vmatpush2.msra.mxu0 0.0
        %366 = vmatprep.subr.mxu0 0.0
        %367 = vmatpush2.msra.mxu0 0.0
        %368 = vmatprep.subr.mxu0 0.0
        %369 = vmatpush2.msra.mxu0 0.0
        %370 = vmatprep.subr.mxu0 0.0
        %371 = vmatpush2.msra.mxu0 0.0
        %372 = vmatprep.subr.mxu0 0.0
        %373 = vmatpush2.msra.mxu0 0.0
        %374 = vmatprep.subr.mxu0 0.0
        %375 = vmatpush2.msra.mxu0 0.0
        %376 = vmatprep.subr.mxu0 0.0
        %377 = vmatpush2.msra.mxu0 0.0
        %378 = vmatprep.subr.mxu0 0.0
        %379 = vmatpush2.msra.mxu0 0.0
        %380 = vmatprep.subr.mxu0 0.0
        %381 = vmatpush2.msra.mxu0 0.0
        %382 = vmatprep.subr.mxu0 0.0
        %383 = vmatpush2.msra.mxu0 0.0
        %384 = vmatprep.mubr.f32.mxu0 0.0
        %385 = vmatmul.mubr.f32.gmra.mxu0 %v318
        %v386 = vpop.f32.mrf.mxu0
        %v387 = vadd.f32 0.0, %v386
        %v388 = vpop.f32.mrf.mxu0
        %389 = vdwg.mxu0
        %v390 = vadd.f32 %v310, %v387
        %391 = vst.msk [vmem:[#allocation2] sm:$0xff] %vm316, %v390
        // Predicated region
        $region45: #{tpu_custom_call.1} parent=31 // pred_check
          %p392 = pneg %p304
        $region46: #{tpu_custom_call.1} parent=31 // pred_check_branch
          %394 = sbr.rel (%p392) target = $region48
        $region47: #{tpu_custom_call.1} parent=31 // pred_region
          %v395 = vld [vmem:[#allocation2] sm:$0xff]
          %v396 = vld [vmem:[%s303] sm:$0x1]
          %v398 = vlaneseq
          %v399 = vshrl.u32 %v398, 7
          %v400 = vsub.s32 0, %v399
          %v401 = vrot.slane %v396, %v400
          %v403 = vadd.f32 %v395, %v401
          %404 = vst.msk [vmem:[%s296] sm:$0xff] %vm316, %v403
        $region48: #{tpu_custom_call.1} parent=31 // pred_fallthru
          _
        %s405 = sand.u32 %s158, 1
        %s406 = scalar_lea.sflag [#allocation5], %s405
        %s407 = sand.u32 %s158, 1
        %s408 = smul.addr %s407, 8
        %s409 = scalar_lea.vmem [#allocation8], %s408
        // Predicated region
        $region49: #{tpu_custom_call.1} parent=31 // pred_check
          %p410 = pneg %p168
        $region50: #{tpu_custom_call.1} parent=31 // pred_check_branch
          %412 = sbr.rel (%p410) target = $region52
        $region51: #{tpu_custom_call.1} parent=31 // pred_region
          %s414 = ssub.s32 128, 128
          %415 = vsyncadd %s406, %s414
          %s416 = sadd.s32 %s33, %s32
          %s417 = sadd.s32 %s416, %s31
          %s418 = smul.addr %s30, 2
          %s419 = sadd.s32 %s417, %s418
          %s420 = smul.addr %s419, 128
          %s421 = scalar_lea.hbm %s3, %s420
          %s423 = sshll.u32 %s409, 4
          %s424 = int_to_ptr.vmem [resolvable:$true] %s423
          %426 = dma.vmem_to_hbm [thread:$0]  %s424, 128, %s421, %s406
        $region52: #{tpu_custom_call.1} parent=31 // pred_fallthru
          _
      $region32: #{tpu_custom_call.1} parent=5 // pred_fallthru
        _
      %p427 = scmp.le.s32.totalorder 2, %s18
      // Predicated region
      $region53: #{tpu_custom_call.1} parent=5 // pred_check
        %p428 = pneg %p427
      $region54: #{tpu_custom_call.1} parent=5 // pred_check_branch
        %430 = sbr.rel (%p428) target = $region56
      $region55: #{tpu_custom_call.1} parent=5 // pred_region
        %s431 = ssub.s32 %s18, 2
        // Predicated region
        $region57: #{tpu_custom_call.1} parent=55 // pred_check
          %p432 = pneg %p174
        $region58: #{tpu_custom_call.1} parent=55 // pred_check_branch
          %434 = sbr.rel (%p432) target = $region60
        $region59: #{tpu_custom_call.1} parent=55 // pred_region
          %s435 = sand.u32 %s159, 1
          %s436 = scalar_lea.sflag [#allocation5], %s435
          %s437 = sand.u32 %s159, 1
          %s438 = smul.addr %s437, 8
          %s439 = scalar_lea.vmem [#allocation8], %s438
          %440 = dma.done %s436, 128
        $region60: #{tpu_custom_call.1} parent=55 // pred_fallthru
          _
      $region56: #{tpu_custom_call.1} parent=5 // pred_fallthru
        _
    $region6: #{tpu_custom_call.1} parent=1 // loop_footer
      %s22 = sadd.s32 1, %s18
    $region7: #{tpu_custom_call.1} parent=1 // loop_footer_branch
      %17 = sbr.rel target = $region3
    $region8: #{tpu_custom_call.1} parent=1 // loop_exit
      _
    %441 = vsyncpa [#allocation4], 1
    %s442 = scalar_lea.sflag [#allocation4], 1
    %443 = vsyncpa %s442, 1
    %444 = vsyncpa [#allocation7], 1
    %s445 = scalar_lea.sflag [#allocation7], 1
    %446 = vsyncpa %s445, 1
    %447 = vsyncpa [#allocation5], 1
    %s448 = scalar_lea.sflag [#allocation5], 1
    %449 = vsyncpa %s448, 1

</llo_original>
